<compile_context>
chip_gen: v5e
topology: v5e:2x2
jax: 0.10.0
libtpu: 0.0.40
codegen_flags: <defaults>
</compile_context>

<pallas_src>
import functools

import jax
import jax.numpy as jnp
from jax.experimental import pallas as pl
from jax.experimental.pallas import tpu as pltpu

_BIG = 1e37  # sentinel 0.5*||x||^2 for padded columns (2*_BIG stays finite in f32)


def _round_up(x, m):
    return ((x + m - 1) // m) * m


def _vmem_capacity_bytes():
    try:
        return int(pltpu.get_tpu_info().vmem_capacity_bytes)
    except Exception:
        return 128 * 1024 * 1024


def _pad_rows(a, total, value):
    pad = total - a.shape[0]
    if pad == 0:
        return a
    fill = jnp.full((pad,) + a.shape[1:], value, dtype=a.dtype)
    return jnp.concatenate([a, fill], axis=0)


def _triplet_tile_kernel(xi_ref, xjt_ref, sqi_ref, hsqj_ref, tcol_ref, trow_ref,
                         out_ref, ap_ref, an_ref, *, margin):
    """One (i, j) tile of the pairwise-distance matrix with online hard mining.

    xi_ref:   (TM, d)  row block of features
    xjt_ref:  (d, TN)  pre-transposed column block of features
    sqi_ref:  (TM, 1)  ||x_i||^2 for the row block (f32)
    hsqj_ref: (1, TN)  0.5*||x_j||^2 for the column block; padded cols = _BIG
    tcol_ref: (TM, 1)  row labels (int32)
    trow_ref: (1, TN)  column labels (int32); padded cols = sentinel label
    out_ref:  (TM, 1)  per-row hinge loss (written at j == last)
    ap_ref/an_ref: (TM, 1) f32 running max / min of (0.5*||xj||^2 - <xi,xj>).
    """
    j = pl.program_id(1)

    @pl.when(j == 0)
    def _init():
        ap_ref[...] = jnp.full_like(ap_ref, -jnp.inf)
        an_ref[...] = jnp.full_like(an_ref, jnp.inf)

    # Canonical NN matmul on the MXU, f32 accumulation.
    gram = jnp.dot(xi_ref[...], xjt_ref[...],
                   preferred_element_type=jnp.float32)            # (TM, TN)

    # Monotone surrogate of dist^2: dist^2 = ||xi||^2 + 2 * score.
    score = hsqj_ref[...] - gram                                   # (TM, TN)

    same_class = tcol_ref[...] == trow_ref[...]                    # (TM, TN)

    # Online hard-positive max / hard-negative min on the surrogate score.
    # Padded columns: label sentinel excludes them from positives; _BIG score
    # excludes them from the negative min.
    ap_ref[...] = jnp.maximum(
        ap_ref[...],
        jnp.max(jnp.where(same_class, score, -jnp.inf), axis=1, keepdims=True))
    an_ref[...] = jnp.minimum(
        an_ref[...],
        jnp.min(jnp.where(same_class, jnp.inf, score), axis=1, keepdims=True))

    @pl.when(j == pl.num_programs(1) - 1)
    def _finalize():
        sqi = sqi_ref[...]
        # sqrt / clamp only on the (TM, 1) winners; clamp matches the 1e-12
        # of the reference implementation.
        d_ap = jnp.sqrt(jnp.maximum(sqi + 2.0 * ap_ref[...], 1e-12))
        d_an = jnp.sqrt(jnp.maximum(sqi + 2.0 * an_ref[...], 1e-12))
        out_ref[...] = jnp.maximum(d_ap - d_an + margin, 0.0).astype(out_ref.dtype)


def ori_triplet_loss(inputs, targets, margin=0.3):
    """inputs: (batch, feat_dim); targets: (batch,) int labels. Returns scalar loss."""
    n, d = inputs.shape

    x = inputs
    labels = targets.astype(jnp.int32)
    pad_label = jnp.max(labels) + jnp.int32(1)        # guaranteed non-colliding

    # Row norms hoisted out of the kernel (computed once, O(n*d), in f32).
    sq = jnp.sum(jnp.square(x.astype(jnp.float32)), axis=1)        # (n,)

    # ---- tile sizes ----------------------------------------------------------
    # Row tile: small, and split in two for moderate batches so the "parallel"
    # row axis can occupy both v7x TensorCores (harmless on v5e/v6e).
    if n <= 16:
        tm = _round_up(n, 8)
    elif n <= 256:
        tm = _round_up((n + 1) // 2, 8)
    else:
        tm = 128
    n_pad_m = _round_up(n, tm)

    # Column tile: 128-multiple, MXU-matched, capped at 256; shrink if the
    # double-buffered working set would exceed the generation's VMEM budget.
    tn = _round_up(n, 128) if n <= 256 else 256
    vmem_cap = _vmem_capacity_bytes()
    itemsize = jnp.dtype(x.dtype).itemsize
    budget = int(0.4 * vmem_cap)
    while tn > 128 and (2 * (tm * d + d * tn) * itemsize + 8 * tm * tn * 4) > budget:
        tn //= 2
    n_pad_n = _round_up(n, tn)

    # ---- padded operands -----------------------------------------------------
    x_rows = _pad_rows(x, n_pad_m, 0)                               # (n_pad_m, d)
    x_cols_t = _pad_rows(x, n_pad_n, 0).T                           # (d, n_pad_n)

    sq_col = _pad_rows(sq, n_pad_m, 0.0).reshape(n_pad_m, 1)
    hsq_row = _pad_rows(0.5 * sq, n_pad_n, _BIG).reshape(1, n_pad_n)
    t_col = _pad_rows(labels, n_pad_m, pad_label).reshape(n_pad_m, 1)
    t_row = _pad_rows(labels, n_pad_n, pad_label).reshape(1, n_pad_n)

    grid = (n_pad_m // tm, n_pad_n // tn)

    # Optional 3-deep buffering on the column operand when per-tile compute is
    # short (small d) and there is more than one column tile to pipeline.
    col_kwargs = {}
    if d <= 256 and grid[1] > 1:
        col_kwargs = dict(pipeline_mode=pl.Buffered(3))
    xjt_spec = pl.BlockSpec((d, tn), lambda i, j: (0, j), **col_kwargs)

    # Generation-aware VMEM request: generous but never the whole chip.
    est = (2 * (tm * d + d * tn) * itemsize        # double-buffered x_i / x_j^T
           + 8 * tm * tn * 4                       # gram / score / mask temporaries
           + 16 * tm * 4 + (1 << 20))              # side inputs, out, scratch
    vmem_limit = int(min(max(2 * est, 32 * 1024 * 1024), int(0.75 * vmem_cap)))

    kernel = functools.partial(_triplet_tile_kernel, margin=float(margin))

    hinge = pl.pallas_call(
        kernel,
        out_shape=jax.ShapeDtypeStruct((n_pad_m, 1), jnp.float32),
        grid=grid,
        in_specs=[
            pl.BlockSpec((tm, d), lambda i, j: (i, 0)),   # x rows
            xjt_spec,                                      # x^T columns
            pl.BlockSpec((tm, 1), lambda i, j: (i, 0)),   # ||x_i||^2
            pl.BlockSpec((1, tn), lambda i, j: (0, j)),   # 0.5*||x_j||^2 (+sentinel)
            pl.BlockSpec((tm, 1), lambda i, j: (i, 0)),   # row labels
            pl.BlockSpec((1, tn), lambda i, j: (0, j)),   # column labels (+sentinel)
        ],
        out_specs=pl.BlockSpec((tm, 1), lambda i, j: (i, 0)),
        scratch_shapes=[
            pltpu.VMEM((tm, 1), jnp.float32),             # running max score (ap)
            pltpu.VMEM((tm, 1), jnp.float32),             # running min score (an)
        ],
        compiler_params=pltpu.CompilerParams(
            dimension_semantics=("parallel", "arbitrary"),
            vmem_limit_bytes=vmem_limit),
    )(x_rows, x_cols_t, sq_col, hsq_row, t_col, t_row)

    # Mean over the real (unpadded) rows.
    return jnp.mean(hinge[:n, 0])


def _reference_loss(inputs, targets, margin=0.3):
    x = inputs.astype(jnp.float32)
    sq = jnp.sum(x * x, axis=1, keepdims=True)
    dist = jnp.sqrt(jnp.maximum(sq + sq.T - 2.0 * (x @ x.T), 1e-12))
    mask = targets[:, None] == targets[None, :]
    dist_ap = jnp.max(jnp.where(mask, dist, -jnp.inf), axis=1)
    dist_an = jnp.min(jnp.where(mask, jnp.inf, dist), axis=1)
    return jnp.mean(jnp.maximum(dist_ap - dist_an + margin, 0.0))


if __name__ == "__main__":
    key = jax.random.PRNGKey(0)
    k1, k2 = jax.random.split(key)

    # Small case: single row/column tile, no column padding beyond 128.
    batch, feat_dim = 8, 128
    x_small = jax.random.normal(k1, (batch, feat_dim), dtype=jnp.float32)
    # 4 identities, 2 samples each (every row has a positive and a negative).
    t_small = jnp.array([0, 0, 1, 1, 2, 2, 3, 3], dtype=jnp.int32)
    loss_small = jax.block_until_ready(ori_triplet_loss(x_small, t_small, margin=0.3))
    ref_small = _reference_loss(x_small, t_small, margin=0.3)
    assert jnp.allclose(loss_small, ref_small, atol=1e-4, rtol=1e-4), (loss_small, ref_small)

    # Larger case: exercises decoupled (3, 2) tiled grid, padding sentinels and
    # the Buffered(3) column pipeline.
    n2, d2 = 300, 128
    x_big = jax.random.normal(k2, (n2, d2), dtype=jnp.float32)
    t_big = jnp.arange(n2, dtype=jnp.int32) % 8
    loss_big = jax.block_until_ready(ori_triplet_loss(x_big, t_big, margin=0.3))
    ref_big = _reference_loss(x_big, t_big, margin=0.3)
    assert jnp.allclose(loss_big, ref_big, atol=1e-4, rtol=1e-4), (loss_big, ref_big)

    print("KERNEL_OK")
</pallas_src>

<mosaic_0001>
module attributes {stable_mosaic.version = 11 : i64} {
  func.func @_triplet_tile_kernel(%arg0: i32, %arg1: i32, %arg2: memref<8x128xf32, #tpu.memory_space<vmem>>, %arg3: memref<128x128xf32, #tpu.memory_space<vmem>>, %arg4: memref<8x1xf32, #tpu.memory_space<vmem>>, %arg5: memref<1x128xf32, #tpu.memory_space<vmem>>, %arg6: memref<8x1xi32, #tpu.memory_space<vmem>>, %arg7: memref<1x128xi32, #tpu.memory_space<vmem>>, %arg8: memref<8x1xf32, #tpu.memory_space<vmem>>, %arg9: memref<8x1xf32, #tpu.memory_space<vmem>>, %arg10: memref<8x1xf32, #tpu.memory_space<vmem>>) attributes {dimension_semantics = [#tpu.dimension_semantics<parallel>, #tpu.dimension_semantics<arbitrary>], iteration_bounds = array<i64: 1, 1>, scalar_prefetch = 0 : i64, scratch_operands = 2 : i64, tpu.core_type = #tpu.core_type<tc>, window_params = [{transform_indices = @transform_0, window_bounds = array<i64: 8, 128>}, {transform_indices = @transform_1, window_bounds = array<i64: 128, 128>}, {transform_indices = @transform_2, window_bounds = array<i64: 8, 1>}, {transform_indices = @transform_3, window_bounds = array<i64: 1, 128>}, {transform_indices = @transform_4, window_bounds = array<i64: 8, 1>}, {transform_indices = @transform_5, window_bounds = array<i64: 1, 128>}, {transform_indices = @transform_6, window_bounds = array<i64: 8, 1>}]} {
    %c0_i32 = arith.constant 0 : i32
    %0 = arith.cmpi eq, %arg1, %c0_i32 : i32
    %1 = arith.extui %0 : i1 to i32
    %c0_i32_0 = arith.constant 0 : i32
    %2 = arith.cmpi ne, %1, %c0_i32_0 : i32
    scf.if %2 {
      %cst_24 = arith.constant 0xFF800000 : f32
      %31 = vector.broadcast %cst_24 : f32 to vector<8x1xf32>
      %c0_25 = arith.constant 0 : index
      %c0_26 = arith.constant 0 : index
      %32 = vector.load %arg9[%c0_25, %c0_26] : memref<8x1xf32, #tpu.memory_space<vmem>>, vector<8x1xf32>
      tpu.vector_store %arg9[%c0_25, %c0_26], %31 {strides = array<i32>} : memref<8x1xf32, #tpu.memory_space<vmem>>, vector<8x1xf32>,
      %cst_27 = arith.constant 0x7F800000 : f32
      %33 = vector.broadcast %cst_27 : f32 to vector<8x1xf32>
      %c0_28 = arith.constant 0 : index
      %c0_29 = arith.constant 0 : index
      %34 = vector.load %arg10[%c0_28, %c0_29] : memref<8x1xf32, #tpu.memory_space<vmem>>, vector<8x1xf32>
      tpu.vector_store %arg10[%c0_28, %c0_29], %33 {strides = array<i32>} : memref<8x1xf32, #tpu.memory_space<vmem>>, vector<8x1xf32>,
    } else {
    }
    %c0 = arith.constant 0 : index
    %c0_1 = arith.constant 0 : index
    %3 = vector.load %arg2[%c0, %c0_1] : memref<8x128xf32, #tpu.memory_space<vmem>>, vector<8x128xf32>
    %c0_2 = arith.constant 0 : index
    %c0_3 = arith.constant 0 : index
    %4 = vector.load %arg3[%c0_2, %c0_3] : memref<128x128xf32, #tpu.memory_space<vmem>>, vector<128x128xf32>
    %cst = arith.constant dense<0.000000e+00> : vector<8x128xf32>
    %5 = tpu.matmul %3, %4, %cst {dimension_numbers = #tpu.dot_dimension_numbers<[1], [0], [0], [1], [0, 0, 1, 1], [], []>} : vector<8x128xf32>, vector<128x128xf32>, vector<8x128xf32> -> vector<8x128xf32>
    %c0_4 = arith.constant 0 : index
    %c0_5 = arith.constant 0 : index
    %6 = vector.load %arg5[%c0_4, %c0_5] : memref<1x128xf32, #tpu.memory_space<vmem>>, vector<1x128xf32>
    %7 = vector.broadcast %6 : vector<1x128xf32> to vector<8x128xf32>
    %8 = arith.subf %7, %5 : vector<8x128xf32>
    %c0_6 = arith.constant 0 : index
    %c0_7 = arith.constant 0 : index
    %9 = vector.load %arg6[%c0_6, %c0_7] : memref<8x1xi32, #tpu.memory_space<vmem>>, vector<8x1xi32>
    %c0_8 = arith.constant 0 : index
    %c0_9 = arith.constant 0 : index
    %10 = vector.load %arg7[%c0_8, %c0_9] : memref<1x128xi32, #tpu.memory_space<vmem>>, vector<1x128xi32>
    %11 = vector.broadcast %9 : vector<8x1xi32> to vector<8x128xi32>
    %12 = vector.broadcast %10 : vector<1x128xi32> to vector<8x128xi32>
    %13 = arith.cmpi eq, %11, %12 : vector<8x128xi32>
    %c0_10 = arith.constant 0 : index
    %c0_11 = arith.constant 0 : index
    %14 = vector.load %arg9[%c0_10, %c0_11] : memref<8x1xf32, #tpu.memory_space<vmem>>, vector<8x1xf32>
    %cst_12 = arith.constant 0xFF800000 : f32
    %15 = vector.broadcast %cst_12 : f32 to vector<8x128xf32>
    %16 = arith.select %13, %8, %15 : vector<8x128xi1>, vector<8x128xf32>
    %cst_13 = arith.constant dense<0xFF800000> : vector<8xf32>
    %17 = vector.multi_reduction <maximumf>, %16, %cst_13 [1] : vector<8x128xf32> to vector<8xf32>
    %18 = vector.shape_cast %17 : vector<8xf32> to vector<8x1xf32>
    %19 = arith.maximumf %14, %18 : vector<8x1xf32>
    %c0_14 = arith.constant 0 : index
    %c0_15 = arith.constant 0 : index
    %20 = vector.load %arg9[%c0_14, %c0_15] : memref<8x1xf32, #tpu.memory_space<vmem>>, vector<8x1xf32>
    tpu.vector_store %arg9[%c0_14, %c0_15], %19 {strides = array<i32>} : memref<8x1xf32, #tpu.memory_space<vmem>>, vector<8x1xf32>,
    %c0_16 = arith.constant 0 : index
    %c0_17 = arith.constant 0 : index
    %21 = vector.load %arg10[%c0_16, %c0_17] : memref<8x1xf32, #tpu.memory_space<vmem>>, vector<8x1xf32>
    %cst_18 = arith.constant 0x7F800000 : f32
    %22 = vector.broadcast %cst_18 : f32 to vector<8x128xf32>
    %23 = arith.select %13, %22, %8 : vector<8x128xi1>, vector<8x128xf32>
    %cst_19 = arith.constant dense<0x7F800000> : vector<8xf32>
    %24 = vector.multi_reduction <minimumf>, %23, %cst_19 [1] : vector<8x128xf32> to vector<8xf32>
    %25 = vector.shape_cast %24 : vector<8xf32> to vector<8x1xf32>
    %26 = arith.minimumf %21, %25 : vector<8x1xf32>
    %c0_20 = arith.constant 0 : index
    %c0_21 = arith.constant 0 : index
    %27 = vector.load %arg10[%c0_20, %c0_21] : memref<8x1xf32, #tpu.memory_space<vmem>>, vector<8x1xf32>
    tpu.vector_store %arg10[%c0_20, %c0_21], %26 {strides = array<i32>} : memref<8x1xf32, #tpu.memory_space<vmem>>, vector<8x1xf32>,
    %c0_i32_22 = arith.constant 0 : i32
    %28 = arith.cmpi eq, %arg1, %c0_i32_22 : i32
    %29 = arith.extui %28 : i1 to i32
    %c0_i32_23 = arith.constant 0 : i32
    %30 = arith.cmpi ne, %29, %c0_i32_23 : i32
    scf.if %30 {
      %c0_24 = arith.constant 0 : index
      %c0_25 = arith.constant 0 : index
      %31 = vector.load %arg4[%c0_24, %c0_25] : memref<8x1xf32, #tpu.memory_space<vmem>>, vector<8x1xf32>
      %c0_26 = arith.constant 0 : index
      %c0_27 = arith.constant 0 : index
      %32 = vector.load %arg9[%c0_26, %c0_27] : memref<8x1xf32, #tpu.memory_space<vmem>>, vector<8x1xf32>
      %cst_28 = arith.constant 2.000000e+00 : f32
      %33 = vector.broadcast %cst_28 : f32 to vector<8x1xf32>
      %34 = arith.mulf %33, %32 : vector<8x1xf32>
      %35 = arith.addf %31, %34 : vector<8x1xf32>
      %cst_29 = arith.constant 9.99999996E-13 : f32
      %36 = vector.broadcast %cst_29 : f32 to vector<8x1xf32>
      %37 = arith.maximumf %35, %36 : vector<8x1xf32>
      %38 = math.sqrt %37 : vector<8x1xf32>
      %c0_30 = arith.constant 0 : index
      %c0_31 = arith.constant 0 : index
      %39 = vector.load %arg10[%c0_30, %c0_31] : memref<8x1xf32, #tpu.memory_space<vmem>>, vector<8x1xf32>
      %cst_32 = arith.constant 2.000000e+00 : f32
      %40 = vector.broadcast %cst_32 : f32 to vector<8x1xf32>
      %41 = arith.mulf %40, %39 : vector<8x1xf32>
      %42 = arith.addf %31, %41 : vector<8x1xf32>
      %cst_33 = arith.constant 9.99999996E-13 : f32
      %43 = vector.broadcast %cst_33 : f32 to vector<8x1xf32>
      %44 = arith.maximumf %42, %43 : vector<8x1xf32>
      %45 = math.sqrt %44 : vector<8x1xf32>
      %46 = arith.subf %38, %45 : vector<8x1xf32>
      %cst_34 = arith.constant 3.000000e-01 : f32
      %47 = vector.broadcast %cst_34 : f32 to vector<8x1xf32>
      %48 = arith.addf %46, %47 : vector<8x1xf32>
      %cst_35 = arith.constant 0.000000e+00 : f32
      %49 = vector.broadcast %cst_35 : f32 to vector<8x1xf32>
      %50 = arith.maximumf %48, %49 : vector<8x1xf32>
      %c0_36 = arith.constant 0 : index
      %c0_37 = arith.constant 0 : index
      %51 = vector.load %arg8[%c0_36, %c0_37] : memref<8x1xf32, #tpu.memory_space<vmem>>, vector<8x1xf32>
      tpu.vector_store %arg8[%c0_36, %c0_37], %50 {strides = array<i32>} : memref<8x1xf32, #tpu.memory_space<vmem>>, vector<8x1xf32>,
    } else {
    }
    return
  }
  func.func @transform_0(%arg0: i32, %arg1: i32) -> (i32, i32) {
    %c0_i32 = arith.constant 0 : i32
    %c0_i32_0 = arith.constant 0 : i32
    return %arg0, %c0_i32 : i32, i32
  }
  func.func @transform_1(%arg0: i32, %arg1: i32) -> (i32, i32) {
    %c0_i32 = arith.constant 0 : i32
    %c0_i32_0 = arith.constant 0 : i32
    return %c0_i32, %arg1 : i32, i32
  }
  func.func @transform_2(%arg0: i32, %arg1: i32) -> (i32, i32) {
    %c0_i32 = arith.constant 0 : i32
    %c0_i32_0 = arith.constant 0 : i32
    return %arg0, %c0_i32 : i32, i32
  }
  func.func @transform_3(%arg0: i32, %arg1: i32) -> (i32, i32) {
    %c0_i32 = arith.constant 0 : i32
    %c0_i32_0 = arith.constant 0 : i32
    return %c0_i32, %arg1 : i32, i32
  }
  func.func @transform_4(%arg0: i32, %arg1: i32) -> (i32, i32) {
    %c0_i32 = arith.constant 0 : i32
    %c0_i32_0 = arith.constant 0 : i32
    return %arg0, %c0_i32 : i32, i32
  }
  func.func @transform_5(%arg0: i32, %arg1: i32) -> (i32, i32) {
    %c0_i32 = arith.constant 0 : i32
    %c0_i32_0 = arith.constant 0 : i32
    return %c0_i32, %arg1 : i32, i32
  }
  func.func @transform_6(%arg0: i32, %arg1: i32) -> (i32, i32) {
    %c0_i32 = arith.constant 0 : i32
    %c0_i32_0 = arith.constant 0 : i32
    return %arg0, %c0_i32 : i32, i32
  }
}

</mosaic_0001>

<llo_original>
// kernel: tpu_custom_call.1
$region0: #{tpu_custom_call.1}
  #allocation0 [shape = 'u32[]', space=smem, size = 0x4, offset = 0x4, fixed_abs, tag = 'smem constant byte address 0x4 - core index']
  #allocation1 [shape = 'u32[72,128]{1,0:T(1,128)}', space=vmem, size = 0x9000, scoped, tag = 'internal scratch']
  #allocation2 [shape = 'f32[8,1]{1,0:T(8,128)}', space=vmem, size = 0x1000, scoped, tag = 'scratch operand']
  #allocation3 [shape = 'f32[8,1]{1,0:T(8,128)}', space=vmem, size = 0x1000, scoped, tag = 'scratch operand']
  %s0 = inlined_call_operand.vmem [shape: f32[8,128], index: 0, kind: input, shape index: {}]
  %s1 = inlined_call_operand.hbm [shape: f32[128,128], index: 1, kind: input, shape index: {}]
  %s2 = inlined_call_operand.vmem [shape: f32[8,1], index: 2, kind: input, shape index: {}]
  %s3 = inlined_call_operand.vmem [shape: f32[1,128], index: 3, kind: input, shape index: {}]
  %s4 = inlined_call_operand.vmem [shape: s32[8,1], index: 4, kind: input, shape index: {}]
  %s5 = inlined_call_operand.vmem [shape: s32[1,128], index: 5, kind: input, shape index: {}]
  %s6 = inlined_call_operand.vmem [shape: f32[8,1], index: 6, kind: output, shape index: {}]
  %s7 = sld [smem:[#allocation0]]
  $region46: #{tpu_custom_call.1} parent=0
    _
  %s9 = ssub.s32 1, %s7
  %s10 = scalar_select 0, %s9, %s7
  $region1: #{tpu_custom_call.1} parent=0
    #allocation4 [shape = 'u8[65536]{0}', space=vmem, size = 0x10000, scoped, tag = 'input window, operand 1, single buffered']
    #allocation5 [shape = 's32[1]{0}', space=sflag, size = 0x4, scoped, tag = 'scoped memory for tpu_custom_call.1']
    %11 = vsyncpa [#allocation5], 0
    // Predicated region
    $region2: #{tpu_custom_call.1} parent=1 // pred_check
      _
    $region3: #{tpu_custom_call.1} parent=1 // pred_check_branch
      %13 = sbr.rel (0) target = $region5
    $region4: #{tpu_custom_call.1} parent=1 // pred_region
      _
    $region5: #{tpu_custom_call.1} parent=1 // pred_fallthru
      _
    // Predicated region
    $region6: #{tpu_custom_call.1} parent=1 // pred_check
      _
    $region7: #{tpu_custom_call.1} parent=1 // pred_check_branch
      %15 = sbr.rel (0) target = $region9
    $region8: #{tpu_custom_call.1} parent=1 // pred_region
      %17 = vsyncadd [#allocation5], 0
      %s18 = sshll.u32 %s1, 4
      %s19 = int_to_ptr.hbm [resolvable:$true] %s18
      %s20 = sshll.u32 [#allocation4], 4
      %s21 = int_to_ptr.vmem [resolvable:$true] %s20
      %26 = dma.hbm_to_vmem [thread:$0]  %s19, 2048, %s21, [#allocation5], 128, 128, 8
    $region9: #{tpu_custom_call.1} parent=1 // pred_fallthru
      _
    // Predicated region
    $region10: #{tpu_custom_call.1} parent=1 // pred_check
      _
    $region11: #{tpu_custom_call.1} parent=1 // pred_check_branch
      %28 = sbr.rel (0) target = $region13
    $region12: #{tpu_custom_call.1} parent=1 // pred_region
      _
    $region13: #{tpu_custom_call.1} parent=1 // pred_fallthru
      _
    // Predicated region
    $region14: #{tpu_custom_call.1} parent=1 // pred_check
      _
    $region15: #{tpu_custom_call.1} parent=1 // pred_check_branch
      %30 = sbr.rel (0) target = $region17
    $region16: #{tpu_custom_call.1} parent=1 // pred_region
      _
    $region17: #{tpu_custom_call.1} parent=1 // pred_fallthru
      _
    // Predicated region
    $region18: #{tpu_custom_call.1} parent=1 // pred_check
      _
    $region19: #{tpu_custom_call.1} parent=1 // pred_check_branch
      %32 = sbr.rel (0) target = $region21
    $region20: #{tpu_custom_call.1} parent=1 // pred_region
      _
    $region21: #{tpu_custom_call.1} parent=1 // pred_fallthru
      _
    // Predicated region
    $region22: #{tpu_custom_call.1} parent=1 // pred_check
      _
    $region23: #{tpu_custom_call.1} parent=1 // pred_check_branch
      %34 = sbr.rel (0) target = $region25
    $region24: #{tpu_custom_call.1} parent=1 // pred_region
      _
    $region25: #{tpu_custom_call.1} parent=1 // pred_fallthru
      _
    // Predicated region
    $region26: #{tpu_custom_call.1} parent=1 // pred_check
      _
    $region27: #{tpu_custom_call.1} parent=1 // pred_check_branch
      %36 = sbr.rel (0) target = $region29
    $region28: #{tpu_custom_call.1} parent=1 // pred_region
      %38 = dma.done [#allocation5], 2048
    $region29: #{tpu_custom_call.1} parent=1 // pred_fallthru
      _
    %p39 = scmp.eq.s32.totalorder 0, 0
    // Predicated region
    $region30: #{tpu_custom_call.1} parent=1 // pred_check
      %p40 = pneg %p39
    $region31: #{tpu_custom_call.1} parent=1 // pred_check_branch
      %42 = sbr.rel (%p40) target = $region33
    $region32: #{tpu_custom_call.1} parent=1 // pred_region
      %vm43 = vcmask 7168
      %44 = vst.msk [vmem:[#allocation2] sm:$0xff] %vm43, -inf
      %45 = vst.msk [vmem:[#allocation3] sm:$0xff] %vm43, inf
    $region33: #{tpu_custom_call.1} parent=1 // pred_fallthru
      _
    %v46 = vld [vmem:[%s0] sm:$0xff]
    %v47 = vld [vmem:[#allocation4] sm:$0xff]
    %v48 = vld [vmem:[#allocation4 + $0x8] sm:$0xff]
    %v49 = vld [vmem:[#allocation4 + $0x10] sm:$0xff]
    %v50 = vld [vmem:[#allocation4 + $0x18] sm:$0xff]
    %v51 = vld [vmem:[#allocation4 + $0x20] sm:$0xff]
    %v52 = vld [vmem:[#allocation4 + $0x28] sm:$0xff]
    %v53 = vld [vmem:[#allocation4 + $0x30] sm:$0xff]
    %v54 = vld [vmem:[#allocation4 + $0x38] sm:$0xff]
    %v55 = vld [vmem:[#allocation4 + $0x40] sm:$0xff]
    %v56 = vld [vmem:[#allocation4 + $0x48] sm:$0xff]
    %v57 = vld [vmem:[#allocation4 + $0x50] sm:$0xff]
    %v58 = vld [vmem:[#allocation4 + $0x58] sm:$0xff]
    %v59 = vld [vmem:[#allocation4 + $0x60] sm:$0xff]
    %v60 = vld [vmem:[#allocation4 + $0x68] sm:$0xff]
    %v61 = vld [vmem:[#allocation4 + $0x70] sm:$0xff]
    %v62 = vld [vmem:[#allocation4 + $0x78] sm:$0xff]
    %63 = vmatpush.msra.mxu0 %v62
    %64 = vmatpush.msra.mxu0 %v61
    %65 = vmatpush.msra.mxu0 %v60
    %66 = vmatpush.msra.mxu0 %v59
    %67 = vmatpush.msra.mxu0 %v58
    %68 = vmatpush.msra.mxu0 %v57
    %69 = vmatpush.msra.mxu0 %v56
    %70 = vmatpush.msra.mxu0 %v55
    %71 = vmatpush.msra.mxu0 %v54
    %72 = vmatpush.msra.mxu0 %v53
    %73 = vmatpush.msra.mxu0 %v52
    %74 = vmatpush.msra.mxu0 %v51
    %75 = vmatpush.msra.mxu0 %v50
    %76 = vmatpush.msra.mxu0 %v49
    %77 = vmatpush.msra.mxu0 %v48
    %78 = vmatpush.msra.mxu0 %v47
    %79 = vmatmul.f32.gmra.mxu0 %v46
    %v80 = vpop.f32.mrf.mxu0
    %v81 = vadd.f32 0.0, %v80
    %82 = vdwg.mxu0
    %v83 = vld [vmem:[%s3] sm:$0x1]
    %v85 = vperm.slane %v83, 0
    %v87 = vsub.f32 %v85, %v81
    %v88 = vld [vmem:[%s4] sm:$0xff]
    %v89 = vld [vmem:[%s5] sm:$0x1]
    %90 = vset.pattern.permute.xlu0 0
    %91 = vperm.xlu0 %90, %v88
    %v92 = vpop.permute.xlu0 %91
    %v93 = vperm.slane %v89, 0
    %vm94 = vcmp.eq.s32.totalorder %v92, %v93
    %v95 = vld [vmem:[#allocation2] sm:$0xff]
    %v96 = vsel %vm94, %v87, -inf
    %97 = vmax.xlane.f32.xlu0 %v96
    %v98 = vpop.xlane.xlu0 %97
    %v99 = vmax.f32 %v95, %v98
    %vm100 = vcmask 7168
    %101 = vst.msk [vmem:[#allocation2] sm:$0xff] %vm100, %v99
    %v102 = vld [vmem:[#allocation3] sm:$0xff]
    %v103 = vsel %vm94, inf, %v87
    %104 = vmin.xlane.f32.xlu0 %v103
    %v105 = vpop.xlane.xlu0 %104
    %v106 = vmin.f32 %v102, %v105
    %107 = vst.msk [vmem:[#allocation3] sm:$0xff] %vm100, %v106
    // Predicated region
    $region34: #{tpu_custom_call.1} parent=1 // pred_check
      %p108 = pneg %p39
    $region35: #{tpu_custom_call.1} parent=1 // pred_check_branch
      %110 = sbr.rel (%p108) target = $region37
    $region36: #{tpu_custom_call.1} parent=1 // pred_region
      %v111 = vld [vmem:[%s2] sm:$0xff]
      %v112 = vld [vmem:[#allocation2] sm:$0xff]
      %v113 = vmul.f32 %v112, 2.0
      %v114 = vadd.f32 %v111, %v113
      %v115 = vmax.f32 %v114, 1e-12
      %v116 = vrsqrt.pop %v115
      %v117 = vmul.f32 %v116, %v115
      %v118 = vmul.f32 %v117, %v116
      %v119 = vmul.f32 0.5, %v118
      %v120 = vsub.f32 1.5, %v119
      %v121 = vmul.f32 %v116, %v120
      %v122 = vmul.f32 %v115, %v121
      %vm123 = vcmp.eq.f32.partialorder %v115, inf
      %v124 = vsel %vm123, %v115, %v122
      %vm125 = vcmp.eq.f32.partialorder %v115, 0.0
      %v126 = vand.u32 %v115, 2147483648
      %v127 = vsel %vm125, %v126, %v124
      %v128 = vld [vmem:[#allocation3] sm:$0xff]
      %v129 = vmul.f32 %v128, 2.0
      %v130 = vadd.f32 %v111, %v129
      %v131 = vmax.f32 %v130, 1e-12
      %v132 = vrsqrt.pop %v131
      %v133 = vmul.f32 %v132, %v131
      %v134 = vmul.f32 %v133, %v132
      %v135 = vmul.f32 0.5, %v134
      %v136 = vsub.f32 1.5, %v135
      %v137 = vmul.f32 %v132, %v136
      %v138 = vmul.f32 %v131, %v137
      %vm139 = vcmp.eq.f32.partialorder %v131, inf
      %v140 = vsel %vm139, %v131, %v138
      %vm141 = vcmp.eq.f32.partialorder %v131, 0.0
      %v142 = vand.u32 %v131, 2147483648
      %v143 = vsel %vm141, %v142, %v140
      %v144 = vsub.f32 %v127, %v143
      %v145 = vadd.f32 %v144, 0.3
      %v146 = vmax.f32 %v145, 0.0
      %147 = vst.msk [vmem:[%s6] sm:$0xff] %vm100, %v146
    $region37: #{tpu_custom_call.1} parent=1 // pred_fallthru
      _
    // Predicated region
    $region38: #{tpu_custom_call.1} parent=1 // pred_check
      _
    $region39: #{tpu_custom_call.1} parent=1 // pred_check_branch
      %149 = sbr.rel (0) target = $region41
    $region40: #{tpu_custom_call.1} parent=1 // pred_region
      _
    $region41: #{tpu_custom_call.1} parent=1 // pred_fallthru
      _
    // Predicated region
    $region42: #{tpu_custom_call.1} parent=1 // pred_check
      _
    $region43: #{tpu_custom_call.1} parent=1 // pred_check_branch
      %151 = sbr.rel (0) target = $region45
    $region44: #{tpu_custom_call.1} parent=1 // pred_region
      _
    $region45: #{tpu_custom_call.1} parent=1 // pred_fallthru
      _
    %152 = vsyncpa [#allocation5], 1

</llo_original>
